<compile_context>
chip_gen: v5e
topology: v5e:2x2
jax: 0.10.0
libtpu: 0.0.40
codegen_flags: <defaults>
</compile_context>

<pallas_src>
import functools

import jax
import jax.numpy as jnp
from jax.experimental import pallas as pl
from jax.experimental.pallas import tpu as pltpu

_LANES = 128
_MAX_TILE_ROWS = 4096        # 4096x128 f32 = 2 MiB/block; 2 inputs x 2 bufs = 8 MiB
_NUM_CORES = 2               # v7x has 2 TCs/chip; extra axis is free on v5e/v6e
_VMEM_LIMIT_BYTES = 48 * 1024 * 1024


def _rmse_kernel(yhat_ref, y_ref, o_ref, acc_ref, *, rows, tile_rows,
                 steps_per_core, g_first_masked, needs_mask):
    c = pl.program_id(0)          # parallel (core) axis
    i = pl.program_id(1)          # sequential reduction axis

    @pl.when(i == 0)
    def _():
        acc_ref[...] = jnp.zeros_like(acc_ref)

    d = yhat_ref[...].astype(jnp.float32) - y_ref[...].astype(jnp.float32)
    dd = d * d

    if needs_mask:
        # Global block index for this (core, step).
        g = c * steps_per_core + i

        @pl.when(g < g_first_masked)
        def _():
            # Full in-range block: no mask work at all.
            acc_ref[...] += jnp.sum(dd, axis=0, keepdims=True)

        @pl.when(g >= g_first_masked)
        def _():
            # Ragged / duplicated tail block: row-only mask (lane tail is
            # already zero-padded in the wrapper, so lanes never need masking).
            row_ids = (jax.lax.broadcasted_iota(jnp.int32, (tile_rows, _LANES), 0)
                       + g * tile_rows)
            acc_ref[...] += jnp.sum(jnp.where(row_ids < rows, dd, 0.0),
                                    axis=0, keepdims=True)
    else:
        acc_ref[...] += jnp.sum(dd, axis=0, keepdims=True)

    @pl.when(i == pl.num_programs(1) - 1)
    def _():
        # Lane-dense per-core partial sums; wrapper reads row 0 only.
        o_ref[0, :, :] = jnp.broadcast_to(acc_ref[...], (8, _LANES))


def rmse_loss(yhat, y, eps=1e-6):
    assert yhat.shape == y.shape, "yhat and y must have the same shape"
    n_elems = yhat.size

    flat_yhat = yhat.reshape(-1)
    flat_y = y.reshape(-1)
    pad = (-n_elems) % _LANES
    if pad:
        # TODO(synk): rare ragged-lane case still pays a full-array pad copy.
        flat_yhat = jnp.pad(flat_yhat, (0, pad))
        flat_y = jnp.pad(flat_y, (0, pad))
    rows = (n_elems + pad) // _LANES
    yhat2d = flat_yhat.reshape(rows, _LANES)
    y2d = flat_y.reshape(rows, _LANES)

    # Tiling: biggest block that comfortably fits VMEM on all generations.
    tile_rows = min(rows, _MAX_TILE_ROWS)          # block == full dims when small
    blocks_total = pl.cdiv(rows, tile_rows)
    num_cores = _NUM_CORES if blocks_total >= _NUM_CORES else 1
    steps_per_core = pl.cdiv(blocks_total, num_cores)
    needs_mask = (num_cores * steps_per_core * tile_rows) > rows
    g_first_masked = rows // tile_rows             # first block touching the tail

    kernel = functools.partial(
        _rmse_kernel,
        rows=int(rows),
        tile_rows=int(tile_rows),
        steps_per_core=int(steps_per_core),
        g_first_masked=int(g_first_masked),
        needs_mask=bool(needs_mask),
    )

    def in_map(c, i):
        # Clamp so the parallel split never addresses an out-of-range block;
        # clamped (duplicate) blocks are fully masked in-kernel.
        return (jnp.minimum(c * steps_per_core + i, blocks_total - 1), 0)

    partials = pl.pallas_call(
        kernel,
        out_shape=jax.ShapeDtypeStruct((num_cores, 8, _LANES), jnp.float32),
        grid_spec=pltpu.PrefetchScalarGridSpec(
            num_scalar_prefetch=0,
            grid=(num_cores, steps_per_core),
            in_specs=[
                pl.BlockSpec((tile_rows, _LANES), in_map),
                pl.BlockSpec((tile_rows, _LANES), in_map),
            ],
            out_specs=pl.BlockSpec((1, 8, _LANES), lambda c, i: (c, 0, 0)),
            scratch_shapes=[pltpu.VMEM((1, _LANES), jnp.float32)],
        ),
        compiler_params=pltpu.CompilerParams(
            dimension_semantics=("parallel", "arbitrary"),
            vmem_limit_bytes=_VMEM_LIMIT_BYTES,
        ),
    )(yhat2d, y2d)

    # Final combine (tiny) in the wrapper: sum per-core lane partials, mean, sqrt.
    sq_sum = jnp.sum(partials[:, 0, :])
    return jnp.sqrt(sq_sum / jnp.float32(n_elems) + jnp.float32(eps))


def rmse_loss_ref(yhat, y, eps=1e-6):
    return jnp.sqrt(jnp.mean((yhat.astype(jnp.float32) - y.astype(jnp.float32)) ** 2) + eps)


if __name__ == "__main__":
    key = jax.random.PRNGKey(0)
    k1, k2 = jax.random.split(key)
    shape = (2, 4, 16, 16)  # NCHW, as in the PyTorch convention
    yhat = jax.random.normal(k1, shape, dtype=jnp.float32)
    y = jax.random.normal(k2, shape, dtype=jnp.float32)

    loss = rmse_loss(yhat, y)
    jax.block_until_ready(loss)

    ref = rmse_loss_ref(yhat, y)
    assert jnp.allclose(loss, ref, rtol=1e-5, atol=1e-6), (loss, ref)
    print("KERNEL_OK")
</pallas_src>

<mosaic_0001>
module attributes {stable_mosaic.version = 11 : i64} {
  func.func @_rmse_kernel(%arg0: i32, %arg1: i32, %arg2: memref<16x128xf32, #tpu.memory_space<vmem>>, %arg3: memref<16x128xf32, #tpu.memory_space<vmem>>, %arg4: memref<1x8x128xf32, #tpu.memory_space<vmem>>, %arg5: memref<1x128xf32, #tpu.memory_space<vmem>>) attributes {dimension_semantics = [#tpu.dimension_semantics<parallel>, #tpu.dimension_semantics<arbitrary>], iteration_bounds = array<i64: 1, 1>, scalar_prefetch = 0 : i64, scratch_operands = 1 : i64, tpu.core_type = #tpu.core_type<tc>, window_params = [{transform_indices = @transform_0, window_bounds = array<i64: 16, 128>}, {transform_indices = @transform_1, window_bounds = array<i64: 16, 128>}, {transform_indices = @transform_2, window_bounds = array<i64: 1, 8, 128>}]} {
    %c0_i32 = arith.constant 0 : i32
    %0 = arith.cmpi eq, %arg1, %c0_i32 : i32
    %1 = arith.extui %0 : i1 to i32
    %c0_i32_0 = arith.constant 0 : i32
    %2 = arith.cmpi ne, %1, %c0_i32_0 : i32
    scf.if %2 {
      %cst_10 = arith.constant 0.000000e+00 : f32
      %15 = vector.broadcast %cst_10 : f32 to vector<1x128xf32>
      %c0_11 = arith.constant 0 : index
      %c0_12 = arith.constant 0 : index
      %16 = vector.load %arg5[%c0_11, %c0_12] : memref<1x128xf32, #tpu.memory_space<vmem>>, vector<1x128xf32>
      tpu.vector_store %arg5[%c0_11, %c0_12], %15 {strides = array<i32>} : memref<1x128xf32, #tpu.memory_space<vmem>>, vector<1x128xf32>,
    } else {
    }
    %c0 = arith.constant 0 : index
    %c0_1 = arith.constant 0 : index
    %3 = vector.load %arg2[%c0, %c0_1] : memref<16x128xf32, #tpu.memory_space<vmem>>, vector<16x128xf32>
    %c0_2 = arith.constant 0 : index
    %c0_3 = arith.constant 0 : index
    %4 = vector.load %arg3[%c0_2, %c0_3] : memref<16x128xf32, #tpu.memory_space<vmem>>, vector<16x128xf32>
    %5 = arith.subf %3, %4 : vector<16x128xf32>
    %6 = arith.mulf %5, %5 : vector<16x128xf32>
    %c0_4 = arith.constant 0 : index
    %c0_5 = arith.constant 0 : index
    %7 = vector.load %arg5[%c0_4, %c0_5] : memref<1x128xf32, #tpu.memory_space<vmem>>, vector<1x128xf32>
    %cst = arith.constant dense<0.000000e+00> : vector<128xf32>
    %8 = vector.multi_reduction <add>, %6, %cst [0] : vector<16x128xf32> to vector<128xf32>
    %9 = vector.shape_cast %8 : vector<128xf32> to vector<1x128xf32>
    %10 = arith.addf %7, %9 : vector<1x128xf32>
    %c0_6 = arith.constant 0 : index
    %c0_7 = arith.constant 0 : index
    %11 = vector.load %arg5[%c0_6, %c0_7] : memref<1x128xf32, #tpu.memory_space<vmem>>, vector<1x128xf32>
    tpu.vector_store %arg5[%c0_6, %c0_7], %10 {strides = array<i32>} : memref<1x128xf32, #tpu.memory_space<vmem>>, vector<1x128xf32>,
    %c0_i32_8 = arith.constant 0 : i32
    %12 = arith.cmpi eq, %arg1, %c0_i32_8 : i32
    %13 = arith.extui %12 : i1 to i32
    %c0_i32_9 = arith.constant 0 : i32
    %14 = arith.cmpi ne, %13, %c0_i32_9 : i32
    scf.if %14 {
      %c0_10 = arith.constant 0 : index
      %c0_11 = arith.constant 0 : index
      %15 = vector.load %arg5[%c0_10, %c0_11] : memref<1x128xf32, #tpu.memory_space<vmem>>, vector<1x128xf32>
      %16 = vector.shape_cast %15 : vector<1x128xf32> to vector<1x128xf32>
      %17 = vector.broadcast %16 : vector<1x128xf32> to vector<8x128xf32>
      %c0_12 = arith.constant 0 : index
      %c0_13 = arith.constant 0 : index
      %c0_14 = arith.constant 0 : index
      %18 = vector.load %arg4[%c0_12, %c0_13, %c0_14] : memref<1x8x128xf32, #tpu.memory_space<vmem>>, vector<1x8x128xf32>
      %19 = vector.shape_cast %18 : vector<1x8x128xf32> to vector<8x128xf32>
      %20 = vector.shape_cast %17 : vector<8x128xf32> to vector<1x8x128xf32>
      tpu.vector_store %arg4[%c0_12, %c0_13, %c0_14], %20 {strides = array<i32>} : memref<1x8x128xf32, #tpu.memory_space<vmem>>, vector<1x8x128xf32>,
    } else {
    }
    return
  }
  func.func @transform_0(%arg0: i32, %arg1: i32) -> (i32, i32) {
    %c1_i32 = arith.constant 1 : i32
    %0 = arith.muli %arg0, %c1_i32 : i32
    %1 = arith.addi %0, %arg1 : i32
    %c0_i32 = arith.constant 0 : i32
    %2 = arith.minsi %1, %c0_i32 : i32
    %c0_i32_0 = arith.constant 0 : i32
    %c0_i32_1 = arith.constant 0 : i32
    return %2, %c0_i32_0 : i32, i32
  }
  func.func @transform_1(%arg0: i32, %arg1: i32) -> (i32, i32) {
    %c1_i32 = arith.constant 1 : i32
    %0 = arith.muli %arg0, %c1_i32 : i32
    %1 = arith.addi %0, %arg1 : i32
    %c0_i32 = arith.constant 0 : i32
    %2 = arith.minsi %1, %c0_i32 : i32
    %c0_i32_0 = arith.constant 0 : i32
    %c0_i32_1 = arith.constant 0 : i32
    return %2, %c0_i32_0 : i32, i32
  }
  func.func @transform_2(%arg0: i32, %arg1: i32) -> (i32, i32, i32) {
    %c0_i32 = arith.constant 0 : i32
    %c0_i32_0 = arith.constant 0 : i32
    %c0_i32_1 = arith.constant 0 : i32
    return %arg0, %c0_i32, %c0_i32_0 : i32, i32, i32
  }
}

</mosaic_0001>

<llo_original>
// kernel: tpu_custom_call.1
$region0: #{tpu_custom_call.1}
  #allocation0 [shape = 'u32[]', space=smem, size = 0x4, offset = 0x4, fixed_abs, tag = 'smem constant byte address 0x4 - core index']
  #allocation1 [shape = 'u32[72,128]{1,0:T(1,128)}', space=vmem, size = 0x9000, scoped, tag = 'internal scratch']
  #allocation2 [shape = 'f32[1,128]{1,0:T(1,128)}', space=vmem, size = 0x200, scoped, tag = 'scratch operand']
  %s0 = inlined_call_operand.hbm [shape: f32[16,128], index: 0, kind: input, shape index: {}]
  %s1 = inlined_call_operand.hbm [shape: f32[16,128], index: 1, kind: input, shape index: {}]
  %s2 = inlined_call_operand.hbm [shape: f32[1,8,128], index: 2, kind: output, shape index: {}]
  %s3 = sld [smem:[#allocation0]]
  $region34: #{tpu_custom_call.1} parent=0
    _
  %s5 = ssub.s32 1, %s3
  %s6 = scalar_select 0, %s5, %s3
  $region1: #{tpu_custom_call.1} parent=0
    #allocation3 [shape = 'u8[8192]{0}', space=vmem, size = 0x2000, scoped, tag = 'input window, operand 0, single buffered']
    #allocation4 [shape = 's32[1]{0}', space=sflag, size = 0x4, scoped, tag = 'scoped memory for tpu_custom_call.1']
    #allocation5 [shape = 's32[1]{0}', space=sflag, size = 0x4, scoped, tag = 'scoped memory for tpu_custom_call.1']
    #allocation6 [shape = 'u8[8192]{0}', space=vmem, size = 0x2000, scoped, tag = 'input window, operand 1, single buffered']
    #allocation7 [shape = 's32[1]{0}', space=sflag, size = 0x4, scoped, tag = 'scoped memory for tpu_custom_call.1']
    #allocation8 [shape = 'u8[4096]{0}', space=vmem, size = 0x1000, scoped, tag = 'output window, operand 0, single buffered']
    %7 = vsyncpa [#allocation4], 0
    %8 = vsyncpa [#allocation7], 0
    %9 = vsyncpa [#allocation5], 0
    // Predicated region
    $region2: #{tpu_custom_call.1} parent=1 // pred_check
      _
    $region3: #{tpu_custom_call.1} parent=1 // pred_check_branch
      %11 = sbr.rel (0) target = $region5
    $region4: #{tpu_custom_call.1} parent=1 // pred_region
      %s12 = sadd.s32 0, 0
      %p13 = scmp.lt.s32.totalorder %s12, 0
      %s14 = scalar_select %p13, %s12, 0
      %s15 = smul.u32 2, %s14
      %17 = vsyncadd [#allocation4], 0
      %s18 = smul.addr %s15, 8
      %s19 = scalar_lea.hbm %s0, %s18
      %s20 = sshll.u32 %s19, 4
      %s21 = int_to_ptr.hbm [resolvable:$true] %s20
      %s22 = sshll.u32 [#allocation3], 4
      %s23 = int_to_ptr.vmem [resolvable:$true] %s22
      %28 = dma.hbm_to_vmem [thread:$0]  %s21, 256, %s23, [#allocation4], 128, 128, 8
    $region5: #{tpu_custom_call.1} parent=1 // pred_fallthru
      _
    // Predicated region
    $region6: #{tpu_custom_call.1} parent=1 // pred_check
      _
    $region7: #{tpu_custom_call.1} parent=1 // pred_check_branch
      %30 = sbr.rel (0) target = $region9
    $region8: #{tpu_custom_call.1} parent=1 // pred_region
      %s31 = sadd.s32 0, 0
      %p32 = scmp.lt.s32.totalorder %s31, 0
      %s33 = scalar_select %p32, %s31, 0
      %s34 = smul.u32 2, %s33
      %36 = vsyncadd [#allocation7], 0
      %s37 = smul.addr %s34, 8
      %s38 = scalar_lea.hbm %s1, %s37
      %s39 = sshll.u32 %s38, 4
      %s40 = int_to_ptr.hbm [resolvable:$true] %s39
      %s41 = sshll.u32 [#allocation6], 4
      %s42 = int_to_ptr.vmem [resolvable:$true] %s41
      %47 = dma.hbm_to_vmem [thread:$0]  %s40, 256, %s42, [#allocation7], 128, 128, 8
    $region9: #{tpu_custom_call.1} parent=1 // pred_fallthru
      _
    // Predicated region
    $region10: #{tpu_custom_call.1} parent=1 // pred_check
      _
    $region11: #{tpu_custom_call.1} parent=1 // pred_check_branch
      %49 = sbr.rel (0) target = $region13
    $region12: #{tpu_custom_call.1} parent=1 // pred_region
      %51 = dma.done [#allocation4], 256
    $region13: #{tpu_custom_call.1} parent=1 // pred_fallthru
      _
    // Predicated region
    $region14: #{tpu_custom_call.1} parent=1 // pred_check
      _
    $region15: #{tpu_custom_call.1} parent=1 // pred_check_branch
      %53 = sbr.rel (0) target = $region17
    $region16: #{tpu_custom_call.1} parent=1 // pred_region
      %55 = dma.done [#allocation7], 256
    $region17: #{tpu_custom_call.1} parent=1 // pred_fallthru
      _
    %s56 = sadd.s32 0, 0
    %p57 = scmp.lt.s32.totalorder %s56, 0
    %s58 = scalar_select %p57, %s56, 0
    %s59 = smul.u32 2, %s58
    %s60 = sadd.s32 0, 0
    %p61 = scmp.lt.s32.totalorder %s60, 0
    %s62 = scalar_select %p61, %s60, 0
    %s63 = smul.u32 2, %s62
    %p64 = scmp.eq.s32.totalorder 0, 0
    // Predicated region
    $region18: #{tpu_custom_call.1} parent=1 // pred_check
      %p65 = pneg %p64
    $region19: #{tpu_custom_call.1} parent=1 // pred_check_branch
      %67 = sbr.rel (%p65) target = $region21
    $region20: #{tpu_custom_call.1} parent=1 // pred_region
      %68 = vst [vmem:[#allocation2] sm:$0x1] 0.0
    $region21: #{tpu_custom_call.1} parent=1 // pred_fallthru
      _
    %v69 = vld [vmem:[#allocation3] sm:$0xff]
    %v70 = vld [vmem:[#allocation3 + $0x8] sm:$0xff]
    %v71 = vld [vmem:[#allocation6] sm:$0xff]
    %v72 = vld [vmem:[#allocation6 + $0x8] sm:$0xff]
    %v73 = vsub.f32 %v69, %v71
    %v74 = vsub.f32 %v70, %v72
    %v75 = vmul.f32 %v73, %v73
    %v76 = vmul.f32 %v74, %v74
    %v77 = vld [vmem:[#allocation2] sm:$0x1]
    %v78 = vadd.f32 %v75, %v76
    %v79 = vrot.slane %v78, 4
    %v80 = vadd.f32 %v78, %v79
    %v81 = vrot.slane %v80, 2
    %v82 = vadd.f32 %v80, %v81
    %v83 = vrot.slane %v82, 1
    %v84 = vadd.f32 %v82, %v83
    %v85 = vadd.f32 %v77, %v84
    %86 = vst [vmem:[#allocation2] sm:$0x1] %v85
    // Predicated region
    $region22: #{tpu_custom_call.1} parent=1 // pred_check
      %p87 = pneg %p64
    $region23: #{tpu_custom_call.1} parent=1 // pred_check_branch
      %89 = sbr.rel (%p87) target = $region25
    $region24: #{tpu_custom_call.1} parent=1 // pred_region
      %v90 = vld [vmem:[#allocation2] sm:$0x1]
      %v92 = vperm.slane %v90, 0
      %94 = vst [vmem:[#allocation8] sm:$0xff] %v92
    $region25: #{tpu_custom_call.1} parent=1 // pred_fallthru
      _
    // Predicated region
    $region26: #{tpu_custom_call.1} parent=1 // pred_check
      _
    $region27: #{tpu_custom_call.1} parent=1 // pred_check_branch
      %96 = sbr.rel (0) target = $region29
    $region28: #{tpu_custom_call.1} parent=1 // pred_region
      %98 = vsyncadd [#allocation5], 0
      %s100 = sshll.u32 [#allocation8], 4
      %s101 = int_to_ptr.vmem [resolvable:$true] %s100
      %s102 = sshll.u32 %s2, 4
      %s103 = int_to_ptr.hbm [resolvable:$true] %s102
      %105 = dma.vmem_to_hbm [thread:$0]  %s101, 128, %s103, [#allocation5]
    $region29: #{tpu_custom_call.1} parent=1 // pred_fallthru
      _
    // Predicated region
    $region30: #{tpu_custom_call.1} parent=1 // pred_check
      _
    $region31: #{tpu_custom_call.1} parent=1 // pred_check_branch
      %107 = sbr.rel (0) target = $region33
    $region32: #{tpu_custom_call.1} parent=1 // pred_region
      %109 = dma.done [#allocation5], 128
    $region33: #{tpu_custom_call.1} parent=1 // pred_fallthru
      _
    %110 = vsyncpa [#allocation4], 1
    %111 = vsyncpa [#allocation7], 1
    %112 = vsyncpa [#allocation5], 1

</llo_original>
